<compile_context>
chip_gen: v7x
topology: tpu7x:2x2x1
jax: 0.10.0
libtpu: 0.0.40
codegen_flags: <defaults>
</compile_context>

<pallas_src>
import jax
import jax.numpy as jnp
from jax.experimental import pallas as pl
from jax.experimental.pallas import tpu as pltpu


def _hbm_copy_kernel(x_hbm_ref, o_hbm_ref, copy_sem):
    # NoGNN has no compute; when an explicit on-device op is requested we do a
    # single HBM->HBM DMA of the whole tensor (no VMEM/vreg round trip).
    cp = pltpu.make_async_copy(x_hbm_ref, o_hbm_ref, copy_sem)
    cp.start()
    cp.wait()


def no_gnn_forward(graphs, x, valid=True, *, use_kernel=False):
    """Pallas equivalent of NoGNN.forward.

    Args:
        graphs: list of COO graph tensors (ignored, as in the reference).
        x: jnp.ndarray of shape [seq_len, bsz, embed_dim].
        valid: unused flag (kept for signature parity).
        use_kernel: if True, route x through a real Pallas op (single
            HBM->HBM DMA).  Default False: zero-cost passthrough.

    Returns:
        jnp.ndarray identical to x.
    """
    del graphs, valid  # unused, matching the reference semantics

    if not use_kernel:
        # NoGNN is a pure passthrough: the fastest correct "kernel" is none.
        return x

    return pl.pallas_call(
        _hbm_copy_kernel,
        out_shape=jax.ShapeDtypeStruct(x.shape, x.dtype),
        in_specs=[pl.BlockSpec(memory_space=pl.ANY)],   # raw HBM ref, no auto-DMA
        out_specs=pl.BlockSpec(memory_space=pl.ANY),    # raw HBM ref, no auto-DMA
        scratch_shapes=[pltpu.SemaphoreType.DMA],       # completion semaphore
    )(x)


if __name__ == "__main__":
    key = jax.random.PRNGKey(0)
    seq_len, bsz, embed_dim = 8, 2, 32

    # x: output of transformer layers, shape [seq_len, bsz, embed_dim]
    x = jax.random.normal(key, (seq_len, bsz, embed_dim), dtype=jnp.float32)

    # Synthetic COO graph list (ignored by the module, provided for parity).
    graphs = [jnp.zeros((2, 4), dtype=jnp.int32) for _ in range(bsz)]

    # Default (recommended) path: zero-copy passthrough.
    out_fast = no_gnn_forward(graphs, x)
    # Explicit Pallas path: single HBM->HBM DMA copy kernel.
    out_kernel = no_gnn_forward(graphs, x, use_kernel=True)

    out_fast, out_kernel = jax.block_until_ready((out_fast, out_kernel))

    assert out_fast.shape == x.shape and out_fast.dtype == x.dtype
    assert out_kernel.shape == x.shape and out_kernel.dtype == x.dtype
    assert bool(jnp.all(out_fast == x))
    assert bool(jnp.all(out_kernel == x))
    print("KERNEL_OK")
</pallas_src>

<mosaic_0001>
module attributes {stable_mosaic.version = 11 : i64} {
  func.func @_hbm_copy_kernel(%arg0: memref<8x2x32xf32, #tpu.memory_space<any>>, %arg1: memref<8x2x32xf32, #tpu.memory_space<any>>, %arg2: memref<!tpu.dma_semaphore, #tpu.memory_space<semaphore_mem>>) attributes {dimension_semantics = [], scalar_prefetch = 0 : i64, scratch_operands = 1 : i64, tpu.core_type = #tpu.core_type<tc>} {
    tpu.enqueue_dma source(%arg0 : memref<8x2x32xf32, #tpu.memory_space<any>>) target(%arg1 : memref<8x2x32xf32, #tpu.memory_space<any>>) target_semaphore(%arg2 : memref<!tpu.dma_semaphore, #tpu.memory_space<semaphore_mem>>)
    tpu.wait_dma2 semaphore(%arg2 : memref<!tpu.dma_semaphore, #tpu.memory_space<semaphore_mem>>) src(%arg0 : memref<8x2x32xf32, #tpu.memory_space<any>>) dst(%arg1 : memref<8x2x32xf32, #tpu.memory_space<any>>)
    return
  }
}

</mosaic_0001>

<llo_original>
// kernel: tpu_custom_call.1
$region0: #{tpu_custom_call.1}
  #allocation0 [shape = 'u32[]', space=smem, size = 0x4, offset = 0x4, fixed_abs, tag = 'smem constant byte address 0x4 - core index']
  #allocation1 [shape = 'u32[144,128]{1,0:T(1,128)}', space=vmem, size = 0x12000, scoped, tag = 'internal scratch']
  #allocation2 [shape = 's32[1]{0}', space=sflag, size = 0x4, scoped, tag = 'scratch operand']
  #allocation3 [shape = 's32[]', space=sflag, size = 0x4, offset = 0, fixed_abs, tag = 'sflag constant byte address 0x0 - dummy sync flag']
  #allocation4 [shape = 'u32[0]{0}', space=smem, size = 0, offset = 0, fixed_abs, tag = 'smem constant byte address 0x0 - null']
  %s0 = inlined_call_operand.hbm [shape: f32[8,2,32], index: 0, kind: input, shape index: {}]
  %s1 = inlined_call_operand.hbm [shape: f32[8,2,32], index: 1, kind: output, shape index: {}]
  %s2 = sld [smem:[#allocation0]]
  $region2: #{tpu_custom_call.1} parent=0
    _
  %s4 = ssub.s32 1, %s2
  %s5 = scalar_select 0, %s4, %s2
  %s7 = sshll.u32 1, 14
  %s8 = sxor.u32 4294967295, %s7
  %s11 = sshll.u32 3, 24
  %s12 = sxor.u32 4294967295, %s11
  %s13 = sand.u32 0, %s12
  %s15 = sor.u32 %s13, 0
  %18 = dma.general %s0, 256, %s1, [#allocation2], [#allocation3], [#allocation4], %s15, 0
  %s19 = smul.u32 8, 2
  %s20 = smul.u32 %s19, 1
  %s21 = sshll.u32 %s20, 4
  %22 = dma.done [#allocation2], %s21
  %23 = vsyncmov [#allocation2]
  %s24 = vpop.sfrf %23
  %p25 = scmp.eq.s32.totalorder %s24, 0
  %p26 = pneg %p25
  %28 = shalt.err (%p26)

</llo_original>
